<compile_context>
chip_gen: v5e
topology: v5e:2x2
jax: 0.10.0
libtpu: 0.0.40
codegen_flags: <defaults>
</compile_context>

<pallas_src>
import functools

import jax
import jax.numpy as jnp
from jax.experimental import pallas as pl
from jax.experimental.pallas import tpu as pltpu

LANE = 128      # lane width / MXU column alignment
SUBLANE = 8     # f32 sublane alignment


def _round_up(n, m):
    return ((n + m - 1) // m) * m


def _vmem_capacity_bytes():
    try:
        return int(pltpu.get_tpu_info().vmem_capacity_bytes)
    except Exception:
        return 128 << 20  # assume v5e/v6e-class if the query is unavailable


# ---------------------------------------------------------------------------
# Kernel: fused 4-layer MLP forward on one (tb, d_in) batch tile.
# ---------------------------------------------------------------------------
def mlp_kernel(x_ref,
               w1_ref, b1_ref,
               w2_ref, b2_ref,
               w3_ref, b3_ref,
               w4_ref, b4_ref,
               o_ref):
    # In-kernel cast to bf16 (free VPU filler under the MXU).
    x = x_ref[...].astype(jnp.bfloat16)

    h = jnp.dot(x, w1_ref[...], preferred_element_type=jnp.float32) + b1_ref[...]
    h = jnp.maximum(h, 0.0)

    h = jnp.dot(h.astype(jnp.bfloat16), w2_ref[...],
                preferred_element_type=jnp.float32) + b2_ref[...]
    h = jnp.maximum(h, 0.0)

    h = jnp.dot(h.astype(jnp.bfloat16), w3_ref[...],
                preferred_element_type=jnp.float32) + b3_ref[...]
    h = jnp.maximum(h, 0.0)

    out = jnp.dot(h.astype(jnp.bfloat16), w4_ref[...],
                  preferred_element_type=jnp.float32) + b4_ref[...]
    o_ref[...] = out.astype(o_ref.dtype)


# ---------------------------------------------------------------------------
# Parameter preparation (one-time): pad the hidden dim to 128 lanes, cast
# weights to bf16. Input-K (d_in) and output-N (d_out) stay at their true
# sizes (full-extent block dims are legal), so no output slice is needed.
# Zero padding keeps padded hidden lanes exactly 0 through ReLU.
# ---------------------------------------------------------------------------
def prepare_params(params):
    d_in, h_dim = params["w1"].shape
    d_out = params["w4"].shape[1]
    h_p = _round_up(h_dim, LANE)

    def pad_w(w, rows, cols):
        return jnp.pad(
            w, ((0, rows - w.shape[0]), (0, cols - w.shape[1]))
        ).astype(jnp.bfloat16)

    def pad_b(b, cols):
        return jnp.pad(b, ((0, 0), (0, cols - b.shape[1]))).astype(jnp.float32)

    return {
        "w1": pad_w(params["w1"], d_in, h_p),  "b1": pad_b(params["b1"], h_p),
        "w2": pad_w(params["w2"], h_p, h_p),   "b2": pad_b(params["b2"], h_p),
        "w3": pad_w(params["w3"], h_p, h_p),   "b3": pad_b(params["b3"], h_p),
        "w4": pad_w(params["w4"], h_p, d_out), "b4": params["b4"].astype(jnp.float32),
    }


# ---------------------------------------------------------------------------
# pallas_call wrapper: grid over batch tiles, weights resident.
# ---------------------------------------------------------------------------
@functools.partial(
    jax.jit, static_argnames=("tb", "vmem_limit_bytes", "weight_buffer_count"))
def _forward_impl(x, pp, *, tb, vmem_limit_bytes, weight_buffer_count):
    B, d_in = x.shape
    h_p = pp["w2"].shape[0]
    d_out = pp["w4"].shape[1]

    if weight_buffer_count > 0:
        # Resident blocks: constant index_map + single buffer -> half VMEM.
        def wspec(shape):
            return pl.BlockSpec(shape, lambda i: (0, 0),
                                pipeline_mode=pl.Buffered(weight_buffer_count))
    else:
        def wspec(shape):
            return pl.BlockSpec(shape, lambda i: (0, 0))

    in_specs = [
        pl.BlockSpec((tb, d_in), lambda i: (i, 0)),      # x tile (per step)
        wspec((d_in, h_p)), wspec((1, h_p)),             # layer 1
        wspec((h_p, h_p)),  wspec((1, h_p)),             # layer 2
        wspec((h_p, h_p)),  wspec((1, h_p)),             # layer 3
        wspec((h_p, d_out)), wspec((1, d_out)),          # layer 4
    ]
    out_specs = pl.BlockSpec((tb, d_out), lambda i: (i, 0))

    flops = 2 * B * (d_in * h_p + 2 * h_p * h_p + h_p * d_out)
    bytes_accessed = (
        int(x.size) * x.dtype.itemsize
        + sum(int(a.size) * a.dtype.itemsize for a in pp.values())
        + B * d_out * 4)
    cost = pl.CostEstimate(flops=flops, transcendentals=0,
                           bytes_accessed=bytes_accessed)

    return pl.pallas_call(
        mlp_kernel,
        out_shape=jax.ShapeDtypeStruct((B, d_out), jnp.float32),
        grid_spec=pltpu.PrefetchScalarGridSpec(
            num_scalar_prefetch=0,
            grid=(pl.cdiv(B, tb),),
            in_specs=in_specs,
            out_specs=out_specs,
        ),
        compiler_params=pltpu.CompilerParams(
            dimension_semantics=("parallel",),
            vmem_limit_bytes=vmem_limit_bytes,
        ),
        cost_estimate=cost,
    )(x,
      pp["w1"], pp["b1"],
      pp["w2"], pp["b2"],
      pp["w3"], pp["b3"],
      pp["w4"], pp["b4"])


# Cache of the weight-buffer count that compiles on this jax/TPU combination.
_WEIGHT_BUF = [None]


def mlp_forward(x, padded_params):
    B, d_in = x.shape
    h_p = padded_params["w2"].shape[0]
    d_out = padded_params["w4"].shape[1]

    vmem_cap = _vmem_capacity_bytes()
    tb_target = 512 if vmem_cap >= (100 << 20) else 256   # v5e/v6e vs v7x
    tb = min(tb_target, _round_up(max(B, 1), SUBLANE))

    # Realistic VMEM need: resident weights/biases (single-buffered) +
    # double-buffered x/out tiles + activation scratch + compiler margin.
    weight_bytes = sum(int(a.size) * a.dtype.itemsize
                       for a in padded_params.values())
    need = (weight_bytes
            + 2 * tb * d_in * 4
            + 2 * tb * d_out * 4
            + 4 * tb * h_p * 4
            + (4 << 20))
    cap = min(int(vmem_cap * 3 // 4), 96 << 20)            # ~48 MiB on v7x
    vmem_limit = int(min(max(need, 32 << 20), cap))

    if _WEIGHT_BUF[0] is None:
        try:
            out = _forward_impl(x, padded_params, tb=tb,
                                vmem_limit_bytes=vmem_limit,
                                weight_buffer_count=1)
            out = jax.block_until_ready(out)
            _WEIGHT_BUF[0] = 1
        except Exception:
            # Fallback: default double-buffering (still correct, more VMEM).
            _WEIGHT_BUF[0] = 0
            out = _forward_impl(x, padded_params, tb=tb,
                                vmem_limit_bytes=vmem_limit,
                                weight_buffer_count=0)
    else:
        out = _forward_impl(x, padded_params, tb=tb,
                            vmem_limit_bytes=vmem_limit,
                            weight_buffer_count=_WEIGHT_BUF[0])

    # matches torch `output.squeeze()` (removes all size-1 dims)
    return jnp.squeeze(out)


# ---------------------------------------------------------------------------
# Init + f32 reference, mirroring nn.Linear default init.
# ---------------------------------------------------------------------------
def init_params(key, input_shape, hidden_shape, output_shape):
    dims = [(input_shape, hidden_shape),
            (hidden_shape, hidden_shape),
            (hidden_shape, hidden_shape),
            (hidden_shape, output_shape)]
    params = {}
    for i, (fan_in, fan_out) in enumerate(dims, start=1):
        key, kw, kb = jax.random.split(key, 3)
        bound = 1.0 / jnp.sqrt(jnp.float32(fan_in))
        params[f"w{i}"] = jax.random.uniform(
            kw, (fan_in, fan_out), jnp.float32, -bound, bound)
        params[f"b{i}"] = jax.random.uniform(
            kb, (1, fan_out), jnp.float32, -bound, bound)
    return params


def mlp_reference(x, params):
    h = jax.nn.relu(x @ params["w1"] + params["b1"])
    h = jax.nn.relu(h @ params["w2"] + params["b2"])
    h = jax.nn.relu(h @ params["w3"] + params["b3"])
    out = h @ params["w4"] + params["b4"]
    return jnp.squeeze(out)


if __name__ == "__main__":
    B, D_IN, HIDDEN, D_OUT = 8, 16, 32, 4

    key = jax.random.PRNGKey(0)
    key, kx = jax.random.split(key)
    x = jax.random.normal(kx, (B, D_IN), jnp.float32)
    params = init_params(key, D_IN, HIDDEN, D_OUT)

    padded_params = prepare_params(params)

    y = mlp_forward(x, padded_params)
    y = jax.block_until_ready(y)

    y_ref = mlp_reference(x, params)
    assert y.shape == y_ref.shape, (y.shape, y_ref.shape)
    # bf16 MXU inputs with f32 accumulation -> loosened tolerance vs f32 ref.
    assert jnp.allclose(y, y_ref, atol=5e-2, rtol=5e-2), "mismatch vs reference"

    print("KERNEL_OK")
</pallas_src>

<mosaic_0001>
module attributes {stable_mosaic.version = 11 : i64} {
  func.func @mlp_kernel(%arg0: i32, %arg1: memref<8x16xf32, #tpu.memory_space<vmem>>, %arg2: memref<16x128xbf16, #tpu.memory_space<vmem>>, %arg3: memref<1x128xf32, #tpu.memory_space<vmem>>, %arg4: memref<128x128xbf16, #tpu.memory_space<vmem>>, %arg5: memref<1x128xf32, #tpu.memory_space<vmem>>, %arg6: memref<128x128xbf16, #tpu.memory_space<vmem>>, %arg7: memref<1x128xf32, #tpu.memory_space<vmem>>, %arg8: memref<128x4xbf16, #tpu.memory_space<vmem>>, %arg9: memref<1x4xf32, #tpu.memory_space<vmem>>, %arg10: memref<8x4xf32, #tpu.memory_space<vmem>>) attributes {dimension_semantics = [#tpu.dimension_semantics<parallel>], iteration_bounds = array<i64: 1>, scalar_prefetch = 0 : i64, scratch_operands = 0 : i64, tpu.core_type = #tpu.core_type<tc>, window_params = [{transform_indices = @transform_0, window_bounds = array<i64: 8, 16>}, {pipeline_mode = #tpu.pipeline_mode<synchronous>, transform_indices = @transform_1, window_bounds = array<i64: 16, 128>}, {pipeline_mode = #tpu.pipeline_mode<synchronous>, transform_indices = @transform_2, window_bounds = array<i64: 1, 128>}, {pipeline_mode = #tpu.pipeline_mode<synchronous>, transform_indices = @transform_3, window_bounds = array<i64: 128, 128>}, {pipeline_mode = #tpu.pipeline_mode<synchronous>, transform_indices = @transform_4, window_bounds = array<i64: 1, 128>}, {pipeline_mode = #tpu.pipeline_mode<synchronous>, transform_indices = @transform_5, window_bounds = array<i64: 128, 128>}, {pipeline_mode = #tpu.pipeline_mode<synchronous>, transform_indices = @transform_6, window_bounds = array<i64: 1, 128>}, {pipeline_mode = #tpu.pipeline_mode<synchronous>, transform_indices = @transform_7, window_bounds = array<i64: 128, 4>}, {pipeline_mode = #tpu.pipeline_mode<synchronous>, transform_indices = @transform_8, window_bounds = array<i64: 1, 4>}, {transform_indices = @transform_9, window_bounds = array<i64: 8, 4>}]} {
    %c0 = arith.constant 0 : index
    %c0_0 = arith.constant 0 : index
    %0 = vector.load %arg1[%c0, %c0_0] : memref<8x16xf32, #tpu.memory_space<vmem>>, vector<8x16xf32>
    %1 = arith.truncf %0 : vector<8x16xf32> to vector<8x16xbf16>
    %c0_1 = arith.constant 0 : index
    %c0_2 = arith.constant 0 : index
    %2 = vector.load %arg2[%c0_1, %c0_2] : memref<16x128xbf16, #tpu.memory_space<vmem>>, vector<16x128xbf16>
    %cst = arith.constant dense<0.000000e+00> : vector<8x128xf32>
    %3 = tpu.matmul %1, %2, %cst {dimension_numbers = #tpu.dot_dimension_numbers<[1], [0], [0], [1], [0, 0, 1, 1], [], []>} : vector<8x16xbf16>, vector<16x128xbf16>, vector<8x128xf32> -> vector<8x128xf32>
    %c0_3 = arith.constant 0 : index
    %c0_4 = arith.constant 0 : index
    %4 = vector.load %arg3[%c0_3, %c0_4] : memref<1x128xf32, #tpu.memory_space<vmem>>, vector<1x128xf32>
    %5 = vector.broadcast %4 : vector<1x128xf32> to vector<8x128xf32>
    %6 = arith.addf %3, %5 : vector<8x128xf32>
    %cst_5 = arith.constant 0.000000e+00 : f32
    %7 = vector.broadcast %cst_5 : f32 to vector<8x128xf32>
    %8 = arith.maximumf %6, %7 : vector<8x128xf32>
    %9 = arith.truncf %8 : vector<8x128xf32> to vector<8x128xbf16>
    %c0_6 = arith.constant 0 : index
    %c0_7 = arith.constant 0 : index
    %10 = vector.load %arg4[%c0_6, %c0_7] : memref<128x128xbf16, #tpu.memory_space<vmem>>, vector<128x128xbf16>
    %cst_8 = arith.constant dense<0.000000e+00> : vector<8x128xf32>
    %11 = tpu.matmul %9, %10, %cst_8 {dimension_numbers = #tpu.dot_dimension_numbers<[1], [0], [0], [1], [0, 0, 1, 1], [], []>} : vector<8x128xbf16>, vector<128x128xbf16>, vector<8x128xf32> -> vector<8x128xf32>
    %c0_9 = arith.constant 0 : index
    %c0_10 = arith.constant 0 : index
    %12 = vector.load %arg5[%c0_9, %c0_10] : memref<1x128xf32, #tpu.memory_space<vmem>>, vector<1x128xf32>
    %13 = vector.broadcast %12 : vector<1x128xf32> to vector<8x128xf32>
    %14 = arith.addf %11, %13 : vector<8x128xf32>
    %cst_11 = arith.constant 0.000000e+00 : f32
    %15 = vector.broadcast %cst_11 : f32 to vector<8x128xf32>
    %16 = arith.maximumf %14, %15 : vector<8x128xf32>
    %17 = arith.truncf %16 : vector<8x128xf32> to vector<8x128xbf16>
    %c0_12 = arith.constant 0 : index
    %c0_13 = arith.constant 0 : index
    %18 = vector.load %arg6[%c0_12, %c0_13] : memref<128x128xbf16, #tpu.memory_space<vmem>>, vector<128x128xbf16>
    %cst_14 = arith.constant dense<0.000000e+00> : vector<8x128xf32>
    %19 = tpu.matmul %17, %18, %cst_14 {dimension_numbers = #tpu.dot_dimension_numbers<[1], [0], [0], [1], [0, 0, 1, 1], [], []>} : vector<8x128xbf16>, vector<128x128xbf16>, vector<8x128xf32> -> vector<8x128xf32>
    %c0_15 = arith.constant 0 : index
    %c0_16 = arith.constant 0 : index
    %20 = vector.load %arg7[%c0_15, %c0_16] : memref<1x128xf32, #tpu.memory_space<vmem>>, vector<1x128xf32>
    %21 = vector.broadcast %20 : vector<1x128xf32> to vector<8x128xf32>
    %22 = arith.addf %19, %21 : vector<8x128xf32>
    %cst_17 = arith.constant 0.000000e+00 : f32
    %23 = vector.broadcast %cst_17 : f32 to vector<8x128xf32>
    %24 = arith.maximumf %22, %23 : vector<8x128xf32>
    %25 = arith.truncf %24 : vector<8x128xf32> to vector<8x128xbf16>
    %c0_18 = arith.constant 0 : index
    %c0_19 = arith.constant 0 : index
    %26 = vector.load %arg8[%c0_18, %c0_19] : memref<128x4xbf16, #tpu.memory_space<vmem>>, vector<128x4xbf16>
    %cst_20 = arith.constant dense<0.000000e+00> : vector<8x4xf32>
    %27 = tpu.matmul %25, %26, %cst_20 {dimension_numbers = #tpu.dot_dimension_numbers<[1], [0], [0], [1], [0, 0, 1, 1], [], []>} : vector<8x128xbf16>, vector<128x4xbf16>, vector<8x4xf32> -> vector<8x4xf32>
    %c0_21 = arith.constant 0 : index
    %c0_22 = arith.constant 0 : index
    %28 = vector.load %arg9[%c0_21, %c0_22] : memref<1x4xf32, #tpu.memory_space<vmem>>, vector<1x4xf32>
    %29 = vector.broadcast %28 : vector<1x4xf32> to vector<8x4xf32>
    %30 = arith.addf %27, %29 : vector<8x4xf32>
    %c0_23 = arith.constant 0 : index
    %c0_24 = arith.constant 0 : index
    %31 = vector.load %arg10[%c0_23, %c0_24] : memref<8x4xf32, #tpu.memory_space<vmem>>, vector<8x4xf32>
    tpu.vector_store %arg10[%c0_23, %c0_24], %30 {strides = array<i32>} : memref<8x4xf32, #tpu.memory_space<vmem>>, vector<8x4xf32>,
    return
  }
  func.func @transform_0(%arg0: i32) -> (i32, i32) {
    %c0_i32 = arith.constant 0 : i32
    %c0_i32_0 = arith.constant 0 : i32
    return %arg0, %c0_i32 : i32, i32
  }
  func.func @transform_1(%arg0: i32) -> (i32, i32) {
    %c0_i32 = arith.constant 0 : i32
    %c0_i32_0 = arith.constant 0 : i32
    %c0_i32_1 = arith.constant 0 : i32
    return %c0_i32, %c0_i32_0 : i32, i32
  }
  func.func @transform_2(%arg0: i32) -> (i32, i32) {
    %c0_i32 = arith.constant 0 : i32
    %c0_i32_0 = arith.constant 0 : i32
    %c0_i32_1 = arith.constant 0 : i32
    return %c0_i32, %c0_i32_0 : i32, i32
  }
  func.func @transform_3(%arg0: i32) -> (i32, i32) {
    %c0_i32 = arith.constant 0 : i32
    %c0_i32_0 = arith.constant 0 : i32
    %c0_i32_1 = arith.constant 0 : i32
    return %c0_i32, %c0_i32_0 : i32, i32
  }
  func.func @transform_4(%arg0: i32) -> (i32, i32) {
    %c0_i32 = arith.constant 0 : i32
    %c0_i32_0 = arith.constant 0 : i32
    %c0_i32_1 = arith.constant 0 : i32
    return %c0_i32, %c0_i32_0 : i32, i32
  }
  func.func @transform_5(%arg0: i32) -> (i32, i32) {
    %c0_i32 = arith.constant 0 : i32
    %c0_i32_0 = arith.constant 0 : i32
    %c0_i32_1 = arith.constant 0 : i32
    return %c0_i32, %c0_i32_0 : i32, i32
  }
  func.func @transform_6(%arg0: i32) -> (i32, i32) {
    %c0_i32 = arith.constant 0 : i32
    %c0_i32_0 = arith.constant 0 : i32
    %c0_i32_1 = arith.constant 0 : i32
    return %c0_i32, %c0_i32_0 : i32, i32
  }
  func.func @transform_7(%arg0: i32) -> (i32, i32) {
    %c0_i32 = arith.constant 0 : i32
    %c0_i32_0 = arith.constant 0 : i32
    %c0_i32_1 = arith.constant 0 : i32
    return %c0_i32, %c0_i32_0 : i32, i32
  }
  func.func @transform_8(%arg0: i32) -> (i32, i32) {
    %c0_i32 = arith.constant 0 : i32
    %c0_i32_0 = arith.constant 0 : i32
    %c0_i32_1 = arith.constant 0 : i32
    return %c0_i32, %c0_i32_0 : i32, i32
  }
  func.func @transform_9(%arg0: i32) -> (i32, i32) {
    %c0_i32 = arith.constant 0 : i32
    %c0_i32_0 = arith.constant 0 : i32
    return %arg0, %c0_i32 : i32, i32
  }
}

module attributes {stable_mosaic.version = 11 : i64} {
  func.func @mlp_kernel(%arg0: i32, %arg1: memref<8x16xf32, #tpu.memory_space<vmem>>, %arg2: memref<16x128xbf16, #tpu.memory_space<vmem>>, %arg3: memref<1x128xf32, #tpu.memory_space<vmem>>, %arg4: memref<128x128xbf16, #tpu.memory_space<vmem>>, %arg5: memref<1x128xf32, #tpu.memory_space<vmem>>, %arg6: memref<128x128xbf16, #tpu.memory_space<vmem>>, %arg7: memref<1x128xf32, #tpu.memory_space<vmem>>, %arg8: memref<128x4xbf16, #tpu.memory_space<vmem>>, %arg9: memref<1x4xf32, #tpu.memory_space<vmem>>, %arg10: memref<8x4xf32, #tpu.memory_space<vmem>>) attributes {dimension_semantics = [#tpu.dimension_semantics<parallel>], iteration_bounds = array<i64: 1>, scalar_prefetch = 0 : i64, scratch_operands = 0 : i64, tpu.core_type = #tpu.core_type<tc>, window_params = [{transform_indices = @transform_0, window_bounds = array<i64: 8, 16>}, {pipeline_mode = #tpu.pipeline_mode<synchronous>, transform_indices = @transform_1, window_bounds = array<i64: 16, 128>}, {pipeline_mode = #tpu.pipeline_mode<synchronous>, transform_indices = @transform_2, window_bounds = array<i64: 1, 128>}, {pipeline_mode = #tpu.pipeline_mode<synchronous>, transform_indices = @transform_3, window_bounds = array<i64: 128, 128>}, {pipeline_mode = #tpu.pipeline_mode<synchronous>, transform_indices = @transform_4, window_bounds = array<i64: 1, 128>}, {pipeline_mode = #tpu.pipeline_mode<synchronous>, transform_indices = @transform_5, window_bounds = array<i64: 128, 128>}, {pipeline_mode = #tpu.pipeline_mode<synchronous>, transform_indices = @transform_6, window_bounds = array<i64: 1, 128>}, {pipeline_mode = #tpu.pipeline_mode<synchronous>, transform_indices = @transform_7, window_bounds = array<i64: 128, 4>}, {pipeline_mode = #tpu.pipeline_mode<synchronous>, transform_indices = @transform_8, window_bounds = array<i64: 1, 4>}, {transform_indices = @transform_9, window_bounds = array<i64: 8, 4>}]} {
    %c0 = arith.constant 0 : index
    %c0_0 = arith.constant 0 : index
    %0 = vector.load %arg1[%c0, %c0_0] : memref<8x16xf32, #tpu.memory_space<vmem>>, vector<8x16xf32>
    %1 = arith.truncf %0 : vector<8x16xf32> to vector<8x16xbf16>
    %c0_1 = arith.constant 0 : index
    %c0_2 = arith.constant 0 : index
    %2 = vector.load %arg2[%c0_1, %c0_2] : memref<16x128xbf16, #tpu.memory_space<vmem>>, vector<16x128xbf16>
    %cst = arith.constant dense<0.000000e+00> : vector<8x128xf32>
    %3 = tpu.matmul %1, %2, %cst {dimension_numbers = #tpu.dot_dimension_numbers<[1], [0], [0], [1], [0, 0, 1, 1], [], []>} : vector<8x16xbf16>, vector<16x128xbf16>, vector<8x128xf32> -> vector<8x128xf32>
    %c0_3 = arith.constant 0 : index
    %c0_4 = arith.constant 0 : index
    %4 = vector.load %arg3[%c0_3, %c0_4] : memref<1x128xf32, #tpu.memory_space<vmem>>, vector<1x128xf32>
    %5 = vector.broadcast %4 : vector<1x128xf32> to vector<8x128xf32>
    %6 = arith.addf %3, %5 : vector<8x128xf32>
    %cst_5 = arith.constant 0.000000e+00 : f32
    %7 = vector.broadcast %cst_5 : f32 to vector<8x128xf32>
    %8 = arith.maximumf %6, %7 : vector<8x128xf32>
    %9 = arith.truncf %8 : vector<8x128xf32> to vector<8x128xbf16>
    %c0_6 = arith.constant 0 : index
    %c0_7 = arith.constant 0 : index
    %10 = vector.load %arg4[%c0_6, %c0_7] : memref<128x128xbf16, #tpu.memory_space<vmem>>, vector<128x128xbf16>
    %cst_8 = arith.constant dense<0.000000e+00> : vector<8x128xf32>
    %11 = tpu.matmul %9, %10, %cst_8 {dimension_numbers = #tpu.dot_dimension_numbers<[1], [0], [0], [1], [0, 0, 1, 1], [], []>} : vector<8x128xbf16>, vector<128x128xbf16>, vector<8x128xf32> -> vector<8x128xf32>
    %c0_9 = arith.constant 0 : index
    %c0_10 = arith.constant 0 : index
    %12 = vector.load %arg5[%c0_9, %c0_10] : memref<1x128xf32, #tpu.memory_space<vmem>>, vector<1x128xf32>
    %13 = vector.broadcast %12 : vector<1x128xf32> to vector<8x128xf32>
    %14 = arith.addf %11, %13 : vector<8x128xf32>
    %cst_11 = arith.constant 0.000000e+00 : f32
    %15 = vector.broadcast %cst_11 : f32 to vector<8x128xf32>
    %16 = arith.maximumf %14, %15 : vector<8x128xf32>
    %17 = arith.truncf %16 : vector<8x128xf32> to vector<8x128xbf16>
    %c0_12 = arith.constant 0 : index
    %c0_13 = arith.constant 0 : index
    %18 = vector.load %arg6[%c0_12, %c0_13] : memref<128x128xbf16, #tpu.memory_space<vmem>>, vector<128x128xbf16>
    %cst_14 = arith.constant dense<0.000000e+00> : vector<8x128xf32>
    %19 = tpu.matmul %17, %18, %cst_14 {dimension_numbers = #tpu.dot_dimension_numbers<[1], [0], [0], [1], [0, 0, 1, 1], [], []>} : vector<8x128xbf16>, vector<128x128xbf16>, vector<8x128xf32> -> vector<8x128xf32>
    %c0_15 = arith.constant 0 : index
    %c0_16 = arith.constant 0 : index
    %20 = vector.load %arg7[%c0_15, %c0_16] : memref<1x128xf32, #tpu.memory_space<vmem>>, vector<1x128xf32>
    %21 = vector.broadcast %20 : vector<1x128xf32> to vector<8x128xf32>
    %22 = arith.addf %19, %21 : vector<8x128xf32>
    %cst_17 = arith.constant 0.000000e+00 : f32
    %23 = vector.broadcast %cst_17 : f32 to vector<8x128xf32>
    %24 = arith.maximumf %22, %23 : vector<8x128xf32>
    %25 = arith.truncf %24 : vector<8x128xf32> to vector<8x128xbf16>
    %c0_18 = arith.constant 0 : index
    %c0_19 = arith.constant 0 : index
    %26 = vector.load %arg8[%c0_18, %c0_19] : memref<128x4xbf16, #tpu.memory_space<vmem>>, vector<128x4xbf16>
    %cst_20 = arith.constant dense<0.000000e+00> : vector<8x4xf32>
    %27 = tpu.matmul %25, %26, %cst_20 {dimension_numbers = #tpu.dot_dimension_numbers<[1], [0], [0], [1], [0, 0, 1, 1], [], []>} : vector<8x128xbf16>, vector<128x4xbf16>, vector<8x4xf32> -> vector<8x4xf32>
    %c0_21 = arith.constant 0 : index
    %c0_22 = arith.constant 0 : index
    %28 = vector.load %arg9[%c0_21, %c0_22] : memref<1x4xf32, #tpu.memory_space<vmem>>, vector<1x4xf32>
    %29 = vector.broadcast %28 : vector<1x4xf32> to vector<8x4xf32>
    %30 = arith.addf %27, %29 : vector<8x4xf32>
    %c0_23 = arith.constant 0 : index
    %c0_24 = arith.constant 0 : index
    %31 = vector.load %arg10[%c0_23, %c0_24] : memref<8x4xf32, #tpu.memory_space<vmem>>, vector<8x4xf32>
    tpu.vector_store %arg10[%c0_23, %c0_24], %30 {strides = array<i32>} : memref<8x4xf32, #tpu.memory_space<vmem>>, vector<8x4xf32>,
    return
  }
  func.func @transform_0(%arg0: i32) -> (i32, i32) {
    %c0_i32 = arith.constant 0 : i32
    %c0_i32_0 = arith.constant 0 : i32
    return %arg0, %c0_i32 : i32, i32
  }
  func.func @transform_1(%arg0: i32) -> (i32, i32) {
    %c0_i32 = arith.constant 0 : i32
    %c0_i32_0 = arith.constant 0 : i32
    %c0_i32_1 = arith.constant 0 : i32
    return %c0_i32, %c0_i32_0 : i32, i32
  }
  func.func @transform_2(%arg0: i32) -> (i32, i32) {
    %c0_i32 = arith.constant 0 : i32
    %c0_i32_0 = arith.constant 0 : i32
    %c0_i32_1 = arith.constant 0 : i32
    return %c0_i32, %c0_i32_0 : i32, i32
  }
  func.func @transform_3(%arg0: i32) -> (i32, i32) {
    %c0_i32 = arith.constant 0 : i32
    %c0_i32_0 = arith.constant 0 : i32
    %c0_i32_1 = arith.constant 0 : i32
    return %c0_i32, %c0_i32_0 : i32, i32
  }
  func.func @transform_4(%arg0: i32) -> (i32, i32) {
    %c0_i32 = arith.constant 0 : i32
    %c0_i32_0 = arith.constant 0 : i32
    %c0_i32_1 = arith.constant 0 : i32
    return %c0_i32, %c0_i32_0 : i32, i32
  }
  func.func @transform_5(%arg0: i32) -> (i32, i32) {
    %c0_i32 = arith.constant 0 : i32
    %c0_i32_0 = arith.constant 0 : i32
    %c0_i32_1 = arith.constant 0 : i32
    return %c0_i32, %c0_i32_0 : i32, i32
  }
  func.func @transform_6(%arg0: i32) -> (i32, i32) {
    %c0_i32 = arith.constant 0 : i32
    %c0_i32_0 = arith.constant 0 : i32
    %c0_i32_1 = arith.constant 0 : i32
    return %c0_i32, %c0_i32_0 : i32, i32
  }
  func.func @transform_7(%arg0: i32) -> (i32, i32) {
    %c0_i32 = arith.constant 0 : i32
    %c0_i32_0 = arith.constant 0 : i32
    %c0_i32_1 = arith.constant 0 : i32
    return %c0_i32, %c0_i32_0 : i32, i32
  }
  func.func @transform_8(%arg0: i32) -> (i32, i32) {
    %c0_i32 = arith.constant 0 : i32
    %c0_i32_0 = arith.constant 0 : i32
    %c0_i32_1 = arith.constant 0 : i32
    return %c0_i32, %c0_i32_0 : i32, i32
  }
  func.func @transform_9(%arg0: i32) -> (i32, i32) {
    %c0_i32 = arith.constant 0 : i32
    %c0_i32_0 = arith.constant 0 : i32
    return %arg0, %c0_i32 : i32, i32
  }
}

</mosaic_0001>

<llo_original>
// kernel: _forward_impl.1
$region0: #{_forward_impl.1}
  #allocation0 [shape = 'u32[]', space=smem, size = 0x4, offset = 0x4, fixed_abs, tag = 'smem constant byte address 0x4 - core index']
  #allocation1 [shape = 'u32[72,128]{1,0:T(1,128)}', space=vmem, size = 0x9000, scoped, tag = 'internal scratch']
  %s0 = inlined_call_operand.hbm [shape: f32[8,16], index: 0, kind: input, shape index: {}]
  %s1 = inlined_call_operand.hbm [shape: bf16[16,128], index: 1, kind: input, shape index: {}]
  %s2 = inlined_call_operand.vmem [shape: f32[1,128], index: 2, kind: input, shape index: {}]
  %s3 = inlined_call_operand.vmem [shape: bf16[128,128], index: 3, kind: input, shape index: {}]
  %s4 = inlined_call_operand.vmem [shape: f32[1,128], index: 4, kind: input, shape index: {}]
  %s5 = inlined_call_operand.hbm [shape: bf16[128,128], index: 5, kind: input, shape index: {}]
  %s6 = inlined_call_operand.vmem [shape: f32[1,128], index: 6, kind: input, shape index: {}]
  %s7 = inlined_call_operand.vmem [shape: bf16[128,4], index: 7, kind: input, shape index: {}]
  %s8 = inlined_call_operand.vmem [shape: f32[1,4], index: 8, kind: input, shape index: {}]
  %s9 = inlined_call_operand.vmem [shape: f32[8,4], index: 9, kind: output, shape index: {}]
  %s10 = sld [smem:[#allocation0]]
  $region58: #{_forward_impl.1} parent=0
    _
  %s12 = ssub.s32 1, %s10
  %s13 = scalar_select 0, %s12, %s10
  $region1: #{_forward_impl.1} parent=0
    #allocation2 [shape = 'u8[4096]{0}', space=vmem, size = 0x1000, scoped, tag = 'input window, operand 0, single buffered']
    #allocation3 [shape = 's32[1]{0}', space=sflag, size = 0x4, scoped, tag = 'scoped memory for _forward_impl.1']
    #allocation4 [shape = 'u8[4096]{0}', space=vmem, size = 0x1000, scoped, tag = 'input window, operand 1, single buffered']
    #allocation5 [shape = 's32[1]{0}', space=sflag, size = 0x4, scoped, tag = 'scoped memory for _forward_impl.1']
    #allocation6 [shape = 'u8[32768]{0}', space=vmem, size = 0x8000, scoped, tag = 'input window, operand 5, single buffered']
    %14 = vsyncpa [#allocation3], 0
    %15 = vsyncpa [#allocation5], 0
    // Predicated region
    $region2: #{_forward_impl.1} parent=1 // pred_check
      _
    $region3: #{_forward_impl.1} parent=1 // pred_check_branch
      %17 = sbr.rel (0) target = $region5
    $region4: #{_forward_impl.1} parent=1 // pred_region
      %19 = vsyncadd [#allocation3], 0
      %s21 = sshll.u32 %s0, 4
      %s22 = int_to_ptr.hbm [resolvable:$true] %s21
      %s23 = sshll.u32 [#allocation2], 4
      %s24 = int_to_ptr.vmem [resolvable:$true] %s23
      %26 = dma.hbm_to_vmem [thread:$0]  %s22, 128, %s24, [#allocation3]
    $region5: #{_forward_impl.1} parent=1 // pred_fallthru
      _
    // Predicated region
    $region6: #{_forward_impl.1} parent=1 // pred_check
      _
    $region7: #{_forward_impl.1} parent=1 // pred_check_branch
      %28 = sbr.rel (0) target = $region9
    $region8: #{_forward_impl.1} parent=1 // pred_region
      %30 = vsyncadd [#allocation5], 0
      %s31 = sshll.u32 %s1, 4
      %s32 = int_to_ptr.hbm [resolvable:$true] %s31
      %s33 = sshll.u32 [#allocation4], 4
      %s34 = int_to_ptr.vmem [resolvable:$true] %s33
      %39 = dma.hbm_to_vmem [thread:$0]  %s32, 128, %s34, [#allocation5], 64, 64, 4
    $region9: #{_forward_impl.1} parent=1 // pred_fallthru
      _
    // Predicated region
    $region10: #{_forward_impl.1} parent=1 // pred_check
      _
    $region11: #{_forward_impl.1} parent=1 // pred_check_branch
      %41 = sbr.rel (0) target = $region13
    $region12: #{_forward_impl.1} parent=1 // pred_region
      _
    $region13: #{_forward_impl.1} parent=1 // pred_fallthru
      _
    // Predicated region
    $region14: #{_forward_impl.1} parent=1 // pred_check
      _
    $region15: #{_forward_impl.1} parent=1 // pred_check_branch
      %43 = sbr.rel (0) target = $region17
    $region16: #{_forward_impl.1} parent=1 // pred_region
      _
    $region17: #{_forward_impl.1} parent=1 // pred_fallthru
      _
    // Predicated region
    $region18: #{_forward_impl.1} parent=1 // pred_check
      _
    $region19: #{_forward_impl.1} parent=1 // pred_check_branch
      %45 = sbr.rel (0) target = $region21
    $region20: #{_forward_impl.1} parent=1 // pred_region
      _
    $region21: #{_forward_impl.1} parent=1 // pred_fallthru
      _
    // Predicated region
    $region22: #{_forward_impl.1} parent=1 // pred_check
      _
    $region23: #{_forward_impl.1} parent=1 // pred_check_branch
      %47 = sbr.rel (0) target = $region25
    $region24: #{_forward_impl.1} parent=1 // pred_region
      %49 = vsyncadd [#allocation5], 0
      %s50 = sshll.u32 %s5, 4
      %s51 = int_to_ptr.hbm [resolvable:$true] %s50
      %s52 = sshll.u32 [#allocation6], 4
      %s53 = int_to_ptr.vmem [resolvable:$true] %s52
      %58 = dma.hbm_to_vmem [thread:$0]  %s51, 1024, %s53, [#allocation5], 64, 64, 4
    $region25: #{_forward_impl.1} parent=1 // pred_fallthru
      _
    // Predicated region
    $region26: #{_forward_impl.1} parent=1 // pred_check
      _
    $region27: #{_forward_impl.1} parent=1 // pred_check_branch
      %60 = sbr.rel (0) target = $region29
    $region28: #{_forward_impl.1} parent=1 // pred_region
      _
    $region29: #{_forward_impl.1} parent=1 // pred_fallthru
      _
    // Predicated region
    $region30: #{_forward_impl.1} parent=1 // pred_check
      _
    $region31: #{_forward_impl.1} parent=1 // pred_check_branch
      %62 = sbr.rel (0) target = $region33
    $region32: #{_forward_impl.1} parent=1 // pred_region
      _
    $region33: #{_forward_impl.1} parent=1 // pred_fallthru
      _
    // Predicated region
    $region34: #{_forward_impl.1} parent=1 // pred_check
      _
    $region35: #{_forward_impl.1} parent=1 // pred_check_branch
      %64 = sbr.rel (0) target = $region37
    $region36: #{_forward_impl.1} parent=1 // pred_region
      _
    $region37: #{_forward_impl.1} parent=1 // pred_fallthru
      _
    // Predicated region
    $region38: #{_forward_impl.1} parent=1 // pred_check
      _
    $region39: #{_forward_impl.1} parent=1 // pred_check_branch
      %66 = sbr.rel (0) target = $region41
    $region40: #{_forward_impl.1} parent=1 // pred_region
      %68 = dma.done [#allocation3], 128
    $region41: #{_forward_impl.1} parent=1 // pred_fallthru
      _
    // Predicated region
    $region42: #{_forward_impl.1} parent=1 // pred_check
      _
    $region43: #{_forward_impl.1} parent=1 // pred_check_branch
      %70 = sbr.rel (0) target = $region45
    $region44: #{_forward_impl.1} parent=1 // pred_region
      %72 = dma.done [#allocation5], 128
    $region45: #{_forward_impl.1} parent=1 // pred_fallthru
      _
    // Predicated region
    $region46: #{_forward_impl.1} parent=1 // pred_check
      _
    $region47: #{_forward_impl.1} parent=1 // pred_check_branch
      %74 = sbr.rel (0) target = $region49
    $region48: #{_forward_impl.1} parent=1 // pred_region
      %76 = dma.done [#allocation5], 1024
    $region49: #{_forward_impl.1} parent=1 // pred_fallthru
      _
    %v78 = vld [vmem:[#allocation2] sm:$0xff]
    %v79 = vpack.c.bf16 %v78, %v78
    %v80 = vld [vmem:[#allocation4] sm:$0xf]
    %v81 = vld [vmem:[#allocation4 + $0x4] sm:$0xf]
    %v82 = vld [vmem:[%s2] sm:$0x1]
    %v84 = vperm.slane %v82, 0
    %v88 = vunpack.c.l.b16 %v80
    %v89 = vunpack.c.l.b16 %v81
    %v90 = vpack.c.b16 %v89, %v88
    %vm92 = vcmask 130048
    %v94 = vsel %vm92, %v79, 0
    %96 = vmatpush.bf16.msra.mxu0 0
    %97 = vmatpush.bf16.msra.mxu0 0
    %98 = vmatpush.bf16.msra.mxu0 0
    %99 = vmatpush.bf16.msra.mxu0 0
    %100 = vmatpush.bf16.msra.mxu0 0
    %101 = vmatpush.bf16.msra.mxu0 0
    %102 = vmatpush.bf16.msra.mxu0 0
    %103 = vmatpush.bf16.msra.mxu0 %v90
    %104 = vmatmul.bf16.gmra.mxu0 %v94
    %v105 = vpop.f32.mrf.mxu0
    %v106 = vadd.f32 %v84, %v105
    %v107 = vpop.f32.mrf.mxu0
    %108 = vdwg.mxu0
    %v109 = vmax.f32 %v106, 0.0
    %v110 = vpack.c.bf16 %v109, %v109
    %v111 = vld [vmem:[%s3] sm:$0xf]
    %v112 = vld [vmem:[%s3 + $0x4] sm:$0xf]
    %v113 = vld [vmem:[%s3 + $0x8] sm:$0xf]
    %v114 = vld [vmem:[%s3 + $0xc] sm:$0xf]
    %v115 = vld [vmem:[%s3 + $0x10] sm:$0xf]
    %v116 = vld [vmem:[%s3 + $0x14] sm:$0xf]
    %v117 = vld [vmem:[%s3 + $0x18] sm:$0xf]
    %v118 = vld [vmem:[%s3 + $0x1c] sm:$0xf]
    %v119 = vld [vmem:[%s3 + $0x20] sm:$0xf]
    %v120 = vld [vmem:[%s3 + $0x24] sm:$0xf]
    %v121 = vld [vmem:[%s3 + $0x28] sm:$0xf]
    %v122 = vld [vmem:[%s3 + $0x2c] sm:$0xf]
    %v123 = vld [vmem:[%s3 + $0x30] sm:$0xf]
    %v124 = vld [vmem:[%s3 + $0x34] sm:$0xf]
    %v125 = vld [vmem:[%s3 + $0x38] sm:$0xf]
    %v126 = vld [vmem:[%s3 + $0x3c] sm:$0xf]
    %v127 = vld [vmem:[%s4] sm:$0x1]
    %v129 = vperm.slane %v127, 0
    %v147 = vunpack.c.l.b16 %v111
    %v148 = vunpack.c.l.b16 %v112
    %v149 = vunpack.c.l.b16 %v113
    %v150 = vunpack.c.l.b16 %v114
    %v151 = vunpack.c.l.b16 %v115
    %v152 = vunpack.c.l.b16 %v116
    %v153 = vunpack.c.l.b16 %v117
    %v154 = vunpack.c.l.b16 %v118
    %v155 = vunpack.c.l.b16 %v119
    %v156 = vunpack.c.l.b16 %v120
    %v157 = vunpack.c.l.b16 %v121
    %v158 = vunpack.c.l.b16 %v122
    %v159 = vunpack.c.l.b16 %v123
    %v160 = vunpack.c.l.b16 %v124
    %v161 = vunpack.c.l.b16 %v125
    %v162 = vunpack.c.l.b16 %v126
    %v163 = vpack.c.b16 %v148, %v147
    %v164 = vpack.c.b16 %v150, %v149
    %v165 = vpack.c.b16 %v152, %v151
    %v166 = vpack.c.b16 %v154, %v153
    %v167 = vpack.c.b16 %v156, %v155
    %v168 = vpack.c.b16 %v158, %v157
    %v169 = vpack.c.b16 %v160, %v159
    %v170 = vpack.c.b16 %v162, %v161
    %179 = vmatpush.bf16.msra.mxu0 %v170
    %180 = vmatpush.bf16.msra.mxu0 %v169
    %181 = vmatpush.bf16.msra.mxu0 %v168
    %182 = vmatpush.bf16.msra.mxu0 %v167
    %183 = vmatpush.bf16.msra.mxu0 %v166
    %184 = vmatpush.bf16.msra.mxu0 %v165
    %185 = vmatpush.bf16.msra.mxu0 %v164
    %186 = vmatpush.bf16.msra.mxu0 %v163
    %187 = vmatmul.bf16.gmra.mxu0 %v110
    %v188 = vpop.f32.mrf.mxu0
    %v189 = vadd.f32 %v129, %v188
    %v190 = vpop.f32.mrf.mxu0
    %191 = vdwg.mxu0
    %v192 = vmax.f32 %v189, 0.0
    %v193 = vpack.c.bf16 %v192, %v192
    %v194 = vld [vmem:[#allocation6] sm:$0xf]
    %v195 = vld [vmem:[#allocation6 + $0x4] sm:$0xf]
    %v196 = vld [vmem:[#allocation6 + $0x8] sm:$0xf]
    %v197 = vld [vmem:[#allocation6 + $0xc] sm:$0xf]
    %v198 = vld [vmem:[#allocation6 + $0x10] sm:$0xf]
    %v199 = vld [vmem:[#allocation6 + $0x14] sm:$0xf]
    %v200 = vld [vmem:[#allocation6 + $0x18] sm:$0xf]
    %v201 = vld [vmem:[#allocation6 + $0x1c] sm:$0xf]
    %v202 = vld [vmem:[#allocation6 + $0x20] sm:$0xf]
    %v203 = vld [vmem:[#allocation6 + $0x24] sm:$0xf]
    %v204 = vld [vmem:[#allocation6 + $0x28] sm:$0xf]
    %v205 = vld [vmem:[#allocation6 + $0x2c] sm:$0xf]
    %v206 = vld [vmem:[#allocation6 + $0x30] sm:$0xf]
    %v207 = vld [vmem:[#allocation6 + $0x34] sm:$0xf]
    %v208 = vld [vmem:[#allocation6 + $0x38] sm:$0xf]
    %v209 = vld [vmem:[#allocation6 + $0x3c] sm:$0xf]
    %v210 = vld [vmem:[%s6] sm:$0x1]
    %v212 = vperm.slane %v210, 0
    %v230 = vunpack.c.l.b16 %v194
    %v231 = vunpack.c.l.b16 %v195
    %v232 = vunpack.c.l.b16 %v196
    %v233 = vunpack.c.l.b16 %v197
    %v234 = vunpack.c.l.b16 %v198
    %v235 = vunpack.c.l.b16 %v199
    %v236 = vunpack.c.l.b16 %v200
    %v237 = vunpack.c.l.b16 %v201
    %v238 = vunpack.c.l.b16 %v202
    %v239 = vunpack.c.l.b16 %v203
    %v240 = vunpack.c.l.b16 %v204
    %v241 = vunpack.c.l.b16 %v205
    %v242 = vunpack.c.l.b16 %v206
    %v243 = vunpack.c.l.b16 %v207
    %v244 = vunpack.c.l.b16 %v208
    %v245 = vunpack.c.l.b16 %v209
    %v246 = vpack.c.b16 %v231, %v230
    %v247 = vpack.c.b16 %v233, %v232
    %v248 = vpack.c.b16 %v235, %v234
    %v249 = vpack.c.b16 %v237, %v236
    %v250 = vpack.c.b16 %v239, %v238
    %v251 = vpack.c.b16 %v241, %v240
    %v252 = vpack.c.b16 %v243, %v242
    %v253 = vpack.c.b16 %v245, %v244
    %262 = vmatpush.bf16.msra.mxu0 %v253
    %263 = vmatpush.bf16.msra.mxu0 %v252
    %264 = vmatpush.bf16.msra.mxu0 %v251
    %265 = vmatpush.bf16.msra.mxu0 %v250
    %266 = vmatpush.bf16.msra.mxu0 %v249
    %267 = vmatpush.bf16.msra.mxu0 %v248
    %268 = vmatpush.bf16.msra.mxu0 %v247
    %269 = vmatpush.bf16.msra.mxu0 %v246
    %270 = vmatmul.bf16.gmra.mxu0 %v193
    %v271 = vpop.f32.mrf.mxu0
    %v272 = vadd.f32 %v212, %v271
    %v273 = vpop.f32.mrf.mxu0
    %274 = vdwg.mxu0
    %v275 = vmax.f32 %v272, 0.0
    %v276 = vpack.c.bf16 %v275, %v275
    %v277 = vld [vmem:[%s7] sm:$0xf]
    %v278 = vld [vmem:[%s7 + $0x4] sm:$0xf]
    %v279 = vld [vmem:[%s7 + $0x8] sm:$0xf]
    %v280 = vld [vmem:[%s7 + $0xc] sm:$0xf]
    %v281 = vld [vmem:[%s7 + $0x10] sm:$0xf]
    %v282 = vld [vmem:[%s7 + $0x14] sm:$0xf]
    %v283 = vld [vmem:[%s7 + $0x18] sm:$0xf]
    %v284 = vld [vmem:[%s7 + $0x1c] sm:$0xf]
    %v285 = vld [vmem:[%s7 + $0x20] sm:$0xf]
    %v286 = vld [vmem:[%s7 + $0x24] sm:$0xf]
    %v287 = vld [vmem:[%s7 + $0x28] sm:$0xf]
    %v288 = vld [vmem:[%s7 + $0x2c] sm:$0xf]
    %v289 = vld [vmem:[%s7 + $0x30] sm:$0xf]
    %v290 = vld [vmem:[%s7 + $0x34] sm:$0xf]
    %v291 = vld [vmem:[%s7 + $0x38] sm:$0xf]
    %v292 = vld [vmem:[%s7 + $0x3c] sm:$0xf]
    %v293 = vld [vmem:[%s8] sm:$0x1]
    %v295 = vperm.slane %v293, 0
    %v313 = vunpack.c.l.b16 %v277
    %v314 = vunpack.c.l.b16 %v278
    %v315 = vunpack.c.l.b16 %v279
    %v316 = vunpack.c.l.b16 %v280
    %v317 = vunpack.c.l.b16 %v281
    %v318 = vunpack.c.l.b16 %v282
    %v319 = vunpack.c.l.b16 %v283
    %v320 = vunpack.c.l.b16 %v284
    %v321 = vunpack.c.l.b16 %v285
    %v322 = vunpack.c.l.b16 %v286
    %v323 = vunpack.c.l.b16 %v287
    %v324 = vunpack.c.l.b16 %v288
    %v325 = vunpack.c.l.b16 %v289
    %v326 = vunpack.c.l.b16 %v290
    %v327 = vunpack.c.l.b16 %v291
    %v328 = vunpack.c.l.b16 %v292
    %v329 = vpack.c.b16 %v314, %v313
    %v330 = vpack.c.b16 %v316, %v315
    %v331 = vpack.c.b16 %v318, %v317
    %v332 = vpack.c.b16 %v320, %v319
    %v333 = vpack.c.b16 %v322, %v321
    %v334 = vpack.c.b16 %v324, %v323
    %v335 = vpack.c.b16 %v326, %v325
    %v336 = vpack.c.b16 %v328, %v327
    %345 = vmatpush.bf16.msra.mxu0 %v336
    %346 = vmatpush.bf16.msra.mxu0 %v335
    %347 = vmatpush.bf16.msra.mxu0 %v334
    %348 = vmatpush.bf16.msra.mxu0 %v333
    %349 = vmatpush.bf16.msra.mxu0 %v332
    %350 = vmatpush.bf16.msra.mxu0 %v331
    %351 = vmatpush.bf16.msra.mxu0 %v330
    %352 = vmatpush.bf16.msra.mxu0 %v329
    %353 = vmatmul.bf16.gmra.mxu0 %v276
    %v354 = vpop.f32.mrf.mxu0
    %v355 = vadd.f32 %v295, %v354
    %v356 = vpop.f32.mrf.mxu0
    %357 = vdwg.mxu0
    %vm358 = vcmask 31744
    %359 = vst.msk [vmem:[%s9] sm:$0xff] %vm358, %v355
    // Predicated region
    $region50: #{_forward_impl.1} parent=1 // pred_check
      _
    $region51: #{_forward_impl.1} parent=1 // pred_check_branch
      %361 = sbr.rel (0) target = $region53
    $region52: #{_forward_impl.1} parent=1 // pred_region
      _
    $region53: #{_forward_impl.1} parent=1 // pred_fallthru
      _
    // Predicated region
    $region54: #{_forward_impl.1} parent=1 // pred_check
      _
    $region55: #{_forward_impl.1} parent=1 // pred_check_branch
      %363 = sbr.rel (0) target = $region57
    $region56: #{_forward_impl.1} parent=1 // pred_region
      _
    $region57: #{_forward_impl.1} parent=1 // pred_fallthru
      _
    %364 = vsyncpa [#allocation3], 1
    %365 = vsyncpa [#allocation5], 1

// kernel: _forward_impl.1
$region0: #{_forward_impl.1}
  #allocation0 [shape = 'u32[]', space=smem, size = 0x4, offset = 0x4, fixed_abs, tag = 'smem constant byte address 0x4 - core index']
  #allocation1 [shape = 'u32[72,128]{1,0:T(1,128)}', space=vmem, size = 0x9000, scoped, tag = 'internal scratch']
  %s0 = inlined_call_operand.hbm [shape: f32[8,16], index: 0, kind: input, shape index: {}]
  %s1 = inlined_call_operand.hbm [shape: bf16[16,128], index: 1, kind: input, shape index: {}]
  %s2 = inlined_call_operand.vmem [shape: f32[1,128], index: 2, kind: input, shape index: {}]
  %s3 = inlined_call_operand.vmem [shape: bf16[128,128], index: 3, kind: input, shape index: {}]
  %s4 = inlined_call_operand.vmem [shape: f32[1,128], index: 4, kind: input, shape index: {}]
  %s5 = inlined_call_operand.hbm [shape: bf16[128,128], index: 5, kind: input, shape index: {}]
  %s6 = inlined_call_operand.vmem [shape: f32[1,128], index: 6, kind: input, shape index: {}]
  %s7 = inlined_call_operand.vmem [shape: bf16[128,4], index: 7, kind: input, shape index: {}]
  %s8 = inlined_call_operand.vmem [shape: f32[1,4], index: 8, kind: input, shape index: {}]
  %s9 = inlined_call_operand.vmem [shape: f32[8,4], index: 9, kind: output, shape index: {}]
  %s10 = sld [smem:[#allocation0]]
  $region58: #{_forward_impl.1} parent=0
    _
  %s12 = ssub.s32 1, %s10
  %s13 = scalar_select 0, %s12, %s10
  $region1: #{_forward_impl.1} parent=0
    #allocation2 [shape = 'u8[4096]{0}', space=vmem, size = 0x1000, scoped, tag = 'input window, operand 0, single buffered']
    #allocation3 [shape = 's32[1]{0}', space=sflag, size = 0x4, scoped, tag = 'scoped memory for _forward_impl.1']
    #allocation4 [shape = 'u8[4096]{0}', space=vmem, size = 0x1000, scoped, tag = 'input window, operand 1, single buffered']
    #allocation5 [shape = 's32[1]{0}', space=sflag, size = 0x4, scoped, tag = 'scoped memory for _forward_impl.1']
    #allocation6 [shape = 'u8[32768]{0}', space=vmem, size = 0x8000, scoped, tag = 'input window, operand 5, single buffered']
    %14 = vsyncpa [#allocation3], 0
    %15 = vsyncpa [#allocation5], 0
    // Predicated region
    $region2: #{_forward_impl.1} parent=1 // pred_check
      _
    $region3: #{_forward_impl.1} parent=1 // pred_check_branch
      %17 = sbr.rel (0) target = $region5
    $region4: #{_forward_impl.1} parent=1 // pred_region
      %19 = vsyncadd [#allocation3], 0
      %s21 = sshll.u32 %s0, 4
      %s22 = int_to_ptr.hbm [resolvable:$true] %s21
      %s23 = sshll.u32 [#allocation2], 4
      %s24 = int_to_ptr.vmem [resolvable:$true] %s23
      %26 = dma.hbm_to_vmem [thread:$0]  %s22, 128, %s24, [#allocation3]
    $region5: #{_forward_impl.1} parent=1 // pred_fallthru
      _
    // Predicated region
    $region6: #{_forward_impl.1} parent=1 // pred_check
      _
    $region7: #{_forward_impl.1} parent=1 // pred_check_branch
      %28 = sbr.rel (0) target = $region9
    $region8: #{_forward_impl.1} parent=1 // pred_region
      %30 = vsyncadd [#allocation5], 0
      %s31 = sshll.u32 %s1, 4
      %s32 = int_to_ptr.hbm [resolvable:$true] %s31
      %s33 = sshll.u32 [#allocation4], 4
      %s34 = int_to_ptr.vmem [resolvable:$true] %s33
      %39 = dma.hbm_to_vmem [thread:$0]  %s32, 128, %s34, [#allocation5], 64, 64, 4
    $region9: #{_forward_impl.1} parent=1 // pred_fallthru
      _
    // Predicated region
    $region10: #{_forward_impl.1} parent=1 // pred_check
      _
    $region11: #{_forward_impl.1} parent=1 // pred_check_branch
      %41 = sbr.rel (0) target = $region13
    $region12: #{_forward_impl.1} parent=1 // pred_region
      _
    $region13: #{_forward_impl.1} parent=1 // pred_fallthru
      _
    // Predicated region
    $region14: #{_forward_impl.1} parent=1 // pred_check
      _
    $region15: #{_forward_impl.1} parent=1 // pred_check_branch
      %43 = sbr.rel (0) target = $region17
    $region16: #{_forward_impl.1} parent=1 // pred_region
      _
    $region17: #{_forward_impl.1} parent=1 // pred_fallthru
      _
    // Predicated region
    $region18: #{_forward_impl.1} parent=1 // pred_check
      _
    $region19: #{_forward_impl.1} parent=1 // pred_check_branch
      %45 = sbr.rel (0) target = $region21
    $region20: #{_forward_impl.1} parent=1 // pred_region
      _
    $region21: #{_forward_impl.1} parent=1 // pred_fallthru
      _
    // Predicated region
    $region22: #{_forward_impl.1} parent=1 // pred_check
      _
    $region23: #{_forward_impl.1} parent=1 // pred_check_branch
      %47 = sbr.rel (0) target = $region25
    $region24: #{_forward_impl.1} parent=1 // pred_region
      %49 = vsyncadd [#allocation5], 0
      %s50 = sshll.u32 %s5, 4
      %s51 = int_to_ptr.hbm [resolvable:$true] %s50
      %s52 = sshll.u32 [#allocation6], 4
      %s53 = int_to_ptr.vmem [resolvable:$true] %s52
      %58 = dma.hbm_to_vmem [thread:$0]  %s51, 1024, %s53, [#allocation5], 64, 64, 4
    $region25: #{_forward_impl.1} parent=1 // pred_fallthru
      _
    // Predicated region
    $region26: #{_forward_impl.1} parent=1 // pred_check
      _
    $region27: #{_forward_impl.1} parent=1 // pred_check_branch
      %60 = sbr.rel (0) target = $region29
    $region28: #{_forward_impl.1} parent=1 // pred_region
      _
    $region29: #{_forward_impl.1} parent=1 // pred_fallthru
      _
    // Predicated region
    $region30: #{_forward_impl.1} parent=1 // pred_check
      _
    $region31: #{_forward_impl.1} parent=1 // pred_check_branch
      %62 = sbr.rel (0) target = $region33
    $region32: #{_forward_impl.1} parent=1 // pred_region
      _
    $region33: #{_forward_impl.1} parent=1 // pred_fallthru
      _
    // Predicated region
    $region34: #{_forward_impl.1} parent=1 // pred_check
      _
    $region35: #{_forward_impl.1} parent=1 // pred_check_branch
      %64 = sbr.rel (0) target = $region37
    $region36: #{_forward_impl.1} parent=1 // pred_region
      _
    $region37: #{_forward_impl.1} parent=1 // pred_fallthru
      _
    // Predicated region
    $region38: #{_forward_impl.1} parent=1 // pred_check
      _
    $region39: #{_forward_impl.1} parent=1 // pred_check_branch
      %66 = sbr.rel (0) target = $region41
    $region40: #{_forward_impl.1} parent=1 // pred_region
      %68 = dma.done [#allocation3], 128
    $region41: #{_forward_impl.1} parent=1 // pred_fallthru
      _
    // Predicated region
    $region42: #{_forward_impl.1} parent=1 // pred_check
      _
    $region43: #{_forward_impl.1} parent=1 // pred_check_branch
      %70 = sbr.rel (0) target = $region45
    $region44: #{_forward_impl.1} parent=1 // pred_region
      %72 = dma.done [#allocation5], 128
    $region45: #{_forward_impl.1} parent=1 // pred_fallthru
      _
    // Predicated region
    $region46: #{_forward_impl.1} parent=1 // pred_check
      _
    $region47: #{_forward_impl.1} parent=1 // pred_check_branch
      %74 = sbr.rel (0) target = $region49
    $region48: #{_forward_impl.1} parent=1 // pred_region
      %76 = dma.done [#allocation5], 1024
    $region49: #{_forward_impl.1} parent=1 // pred_fallthru
      _
    %v78 = vld [vmem:[#allocation2] sm:$0xff]
    %v79 = vpack.c.bf16 %v78, %v78
    %v80 = vld [vmem:[#allocation4] sm:$0xf]
    %v81 = vld [vmem:[#allocation4 + $0x4] sm:$0xf]
    %v82 = vld [vmem:[%s2] sm:$0x1]
    %v84 = vperm.slane %v82, 0
    %v88 = vunpack.c.l.b16 %v80
    %v89 = vunpack.c.l.b16 %v81
    %v90 = vpack.c.b16 %v89, %v88
    %vm92 = vcmask 130048
    %v94 = vsel %vm92, %v79, 0
    %96 = vmatpush.bf16.msra.mxu0 0
    %97 = vmatpush.bf16.msra.mxu0 0
    %98 = vmatpush.bf16.msra.mxu0 0
    %99 = vmatpush.bf16.msra.mxu0 0
    %100 = vmatpush.bf16.msra.mxu0 0
    %101 = vmatpush.bf16.msra.mxu0 0
    %102 = vmatpush.bf16.msra.mxu0 0
    %103 = vmatpush.bf16.msra.mxu0 %v90
    %104 = vmatmul.bf16.gmra.mxu0 %v94
    %v105 = vpop.f32.mrf.mxu0
    %v106 = vadd.f32 %v84, %v105
    %v107 = vpop.f32.mrf.mxu0
    %108 = vdwg.mxu0
    %v109 = vmax.f32 %v106, 0.0
    %v110 = vpack.c.bf16 %v109, %v109
    %v111 = vld [vmem:[%s3] sm:$0xf]
    %v112 = vld [vmem:[%s3 + $0x4] sm:$0xf]
    %v113 = vld [vmem:[%s3 + $0x8] sm:$0xf]
    %v114 = vld [vmem:[%s3 + $0xc] sm:$0xf]
    %v115 = vld [vmem:[%s3 + $0x10] sm:$0xf]
    %v116 = vld [vmem:[%s3 + $0x14] sm:$0xf]
    %v117 = vld [vmem:[%s3 + $0x18] sm:$0xf]
    %v118 = vld [vmem:[%s3 + $0x1c] sm:$0xf]
    %v119 = vld [vmem:[%s3 + $0x20] sm:$0xf]
    %v120 = vld [vmem:[%s3 + $0x24] sm:$0xf]
    %v121 = vld [vmem:[%s3 + $0x28] sm:$0xf]
    %v122 = vld [vmem:[%s3 + $0x2c] sm:$0xf]
    %v123 = vld [vmem:[%s3 + $0x30] sm:$0xf]
    %v124 = vld [vmem:[%s3 + $0x34] sm:$0xf]
    %v125 = vld [vmem:[%s3 + $0x38] sm:$0xf]
    %v126 = vld [vmem:[%s3 + $0x3c] sm:$0xf]
    %v127 = vld [vmem:[%s4] sm:$0x1]
    %v129 = vperm.slane %v127, 0
    %v147 = vunpack.c.l.b16 %v111
    %v148 = vunpack.c.l.b16 %v112
    %v149 = vunpack.c.l.b16 %v113
    %v150 = vunpack.c.l.b16 %v114
    %v151 = vunpack.c.l.b16 %v115
    %v152 = vunpack.c.l.b16 %v116
    %v153 = vunpack.c.l.b16 %v117
    %v154 = vunpack.c.l.b16 %v118
    %v155 = vunpack.c.l.b16 %v119
    %v156 = vunpack.c.l.b16 %v120
    %v157 = vunpack.c.l.b16 %v121
    %v158 = vunpack.c.l.b16 %v122
    %v159 = vunpack.c.l.b16 %v123
    %v160 = vunpack.c.l.b16 %v124
    %v161 = vunpack.c.l.b16 %v125
    %v162 = vunpack.c.l.b16 %v126
    %v163 = vpack.c.b16 %v148, %v147
    %v164 = vpack.c.b16 %v150, %v149
    %v165 = vpack.c.b16 %v152, %v151
    %v166 = vpack.c.b16 %v154, %v153
    %v167 = vpack.c.b16 %v156, %v155
    %v168 = vpack.c.b16 %v158, %v157
    %v169 = vpack.c.b16 %v160, %v159
    %v170 = vpack.c.b16 %v162, %v161
    %179 = vmatpush.bf16.msra.mxu0 %v170
    %180 = vmatpush.bf16.msra.mxu0 %v169
    %181 = vmatpush.bf16.msra.mxu0 %v168
    %182 = vmatpush.bf16.msra.mxu0 %v167
    %183 = vmatpush.bf16.msra.mxu0 %v166
    %184 = vmatpush.bf16.msra.mxu0 %v165
    %185 = vmatpush.bf16.msra.mxu0 %v164
    %186 = vmatpush.bf16.msra.mxu0 %v163
    %187 = vmatmul.bf16.gmra.mxu0 %v110
    %v188 = vpop.f32.mrf.mxu0
    %v189 = vadd.f32 %v129, %v188
    %v190 = vpop.f32.mrf.mxu0
    %191 = vdwg.mxu0
    %v192 = vmax.f32 %v189, 0.0
    %v193 = vpack.c.bf16 %v192, %v192
    %v194 = vld [vmem:[#allocation6] sm:$0xf]
    %v195 = vld [vmem:[#allocation6 + $0x4] sm:$0xf]
    %v196 = vld [vmem:[#allocation6 + $0x8] sm:$0xf]
    %v197 = vld [vmem:[#allocation6 + $0xc] sm:$0xf]
    %v198 = vld [vmem:[#allocation6 + $0x10] sm:$0xf]
    %v199 = vld [vmem:[#allocation6 + $0x14] sm:$0xf]
    %v200 = vld [vmem:[#allocation6 + $0x18] sm:$0xf]
    %v201 = vld [vmem:[#allocation6 + $0x1c] sm:$0xf]
    %v202 = vld [vmem:[#allocation6 + $0x20] sm:$0xf]
    %v203 = vld [vmem:[#allocation6 + $0x24] sm:$0xf]
    %v204 = vld [vmem:[#allocation6 + $0x28] sm:$0xf]
    %v205 = vld [vmem:[#allocation6 + $0x2c] sm:$0xf]
    %v206 = vld [vmem:[#allocation6 + $0x30] sm:$0xf]
    %v207 = vld [vmem:[#allocation6 + $0x34] sm:$0xf]
    %v208 = vld [vmem:[#allocation6 + $0x38] sm:$0xf]
    %v209 = vld [vmem:[#allocation6 + $0x3c] sm:$0xf]
    %v210 = vld [vmem:[%s6] sm:$0x1]
    %v212 = vperm.slane %v210, 0
    %v230 = vunpack.c.l.b16 %v194
    %v231 = vunpack.c.l.b16 %v195
    %v232 = vunpack.c.l.b16 %v196
    %v233 = vunpack.c.l.b16 %v197
    %v234 = vunpack.c.l.b16 %v198
    %v235 = vunpack.c.l.b16 %v199
    %v236 = vunpack.c.l.b16 %v200
    %v237 = vunpack.c.l.b16 %v201
    %v238 = vunpack.c.l.b16 %v202
    %v239 = vunpack.c.l.b16 %v203
    %v240 = vunpack.c.l.b16 %v204
    %v241 = vunpack.c.l.b16 %v205
    %v242 = vunpack.c.l.b16 %v206
    %v243 = vunpack.c.l.b16 %v207
    %v244 = vunpack.c.l.b16 %v208
    %v245 = vunpack.c.l.b16 %v209
    %v246 = vpack.c.b16 %v231, %v230
    %v247 = vpack.c.b16 %v233, %v232
    %v248 = vpack.c.b16 %v235, %v234
    %v249 = vpack.c.b16 %v237, %v236
    %v250 = vpack.c.b16 %v239, %v238
    %v251 = vpack.c.b16 %v241, %v240
    %v252 = vpack.c.b16 %v243, %v242
    %v253 = vpack.c.b16 %v245, %v244
    %262 = vmatpush.bf16.msra.mxu0 %v253
    %263 = vmatpush.bf16.msra.mxu0 %v252
    %264 = vmatpush.bf16.msra.mxu0 %v251
    %265 = vmatpush.bf16.msra.mxu0 %v250
    %266 = vmatpush.bf16.msra.mxu0 %v249
    %267 = vmatpush.bf16.msra.mxu0 %v248
    %268 = vmatpush.bf16.msra.mxu0 %v247
    %269 = vmatpush.bf16.msra.mxu0 %v246
    %270 = vmatmul.bf16.gmra.mxu0 %v193
    %v271 = vpop.f32.mrf.mxu0
    %v272 = vadd.f32 %v212, %v271
    %v273 = vpop.f32.mrf.mxu0
    %274 = vdwg.mxu0
    %v275 = vmax.f32 %v272, 0.0
    %v276 = vpack.c.bf16 %v275, %v275
    %v277 = vld [vmem:[%s7] sm:$0xf]
    %v278 = vld [vmem:[%s7 + $0x4] sm:$0xf]
    %v279 = vld [vmem:[%s7 + $0x8] sm:$0xf]
    %v280 = vld [vmem:[%s7 + $0xc] sm:$0xf]
    %v281 = vld [vmem:[%s7 + $0x10] sm:$0xf]
    %v282 = vld [vmem:[%s7 + $0x14] sm:$0xf]
    %v283 = vld [vmem:[%s7 + $0x18] sm:$0xf]
    %v284 = vld [vmem:[%s7 + $0x1c] sm:$0xf]
    %v285 = vld [vmem:[%s7 + $0x20] sm:$0xf]
    %v286 = vld [vmem:[%s7 + $0x24] sm:$0xf]
    %v287 = vld [vmem:[%s7 + $0x28] sm:$0xf]
    %v288 = vld [vmem:[%s7 + $0x2c] sm:$0xf]
    %v289 = vld [vmem:[%s7 + $0x30] sm:$0xf]
    %v290 = vld [vmem:[%s7 + $0x34] sm:$0xf]
    %v291 = vld [vmem:[%s7 + $0x38] sm:$0xf]
    %v292 = vld [vmem:[%s7 + $0x3c] sm:$0xf]
    %v293 = vld [vmem:[%s8] sm:$0x1]
    %v295 = vperm.slane %v293, 0
    %v313 = vunpack.c.l.b16 %v277
    %v314 = vunpack.c.l.b16 %v278
    %v315 = vunpack.c.l.b16 %v279
    %v316 = vunpack.c.l.b16 %v280
    %v317 = vunpack.c.l.b16 %v281
    %v318 = vunpack.c.l.b16 %v282
    %v319 = vunpack.c.l.b16 %v283
    %v320 = vunpack.c.l.b16 %v284
    %v321 = vunpack.c.l.b16 %v285
    %v322 = vunpack.c.l.b16 %v286
    %v323 = vunpack.c.l.b16 %v287
    %v324 = vunpack.c.l.b16 %v288
    %v325 = vunpack.c.l.b16 %v289
    %v326 = vunpack.c.l.b16 %v290
    %v327 = vunpack.c.l.b16 %v291
    %v328 = vunpack.c.l.b16 %v292
    %v329 = vpack.c.b16 %v314, %v313
    %v330 = vpack.c.b16 %v316, %v315
    %v331 = vpack.c.b16 %v318, %v317
    %v332 = vpack.c.b16 %v320, %v319
    %v333 = vpack.c.b16 %v322, %v321
    %v334 = vpack.c.b16 %v324, %v323
    %v335 = vpack.c.b16 %v326, %v325
    %v336 = vpack.c.b16 %v328, %v327
    %345 = vmatpush.bf16.msra.mxu0 %v336
    %346 = vmatpush.bf16.msra.mxu0 %v335
    %347 = vmatpush.bf16.msra.mxu0 %v334
    %348 = vmatpush.bf16.msra.mxu0 %v333
    %349 = vmatpush.bf16.msra.mxu0 %v332
    %350 = vmatpush.bf16.msra.mxu0 %v331
    %351 = vmatpush.bf16.msra.mxu0 %v330
    %352 = vmatpush.bf16.msra.mxu0 %v329
    %353 = vmatmul.bf16.gmra.mxu0 %v276
    %v354 = vpop.f32.mrf.mxu0
    %v355 = vadd.f32 %v295, %v354
    %v356 = vpop.f32.mrf.mxu0
    %357 = vdwg.mxu0
    %vm358 = vcmask 31744
    %359 = vst.msk [vmem:[%s9] sm:$0xff] %vm358, %v355
    // Predicated region
    $region50: #{_forward_impl.1} parent=1 // pred_check
      _
    $region51: #{_forward_impl.1} parent=1 // pred_check_branch
      %361 = sbr.rel (0) target = $region53
    $region52: #{_forward_impl.1} parent=1 // pred_region
      _
    $region53: #{_forward_impl.1} parent=1 // pred_fallthru
      _
    // Predicated region
    $region54: #{_forward_impl.1} parent=1 // pred_check
      _
    $region55: #{_forward_impl.1} parent=1 // pred_check_branch
      %363 = sbr.rel (0) target = $region57
    $region56: #{_forward_impl.1} parent=1 // pred_region
      _
    $region57: #{_forward_impl.1} parent=1 // pred_fallthru
      _
    %364 = vsyncpa [#allocation3], 1
    %365 = vsyncpa [#allocation5], 1

</llo_original>
